<compile_context>
chip_gen: v5e
topology: v5e:2x2
jax: 0.10.0
libtpu: 0.0.40
codegen_flags: <defaults>
</compile_context>

<pallas_src>
import functools

import jax
import jax.numpy as jnp
from jax.experimental import pallas as pl
from jax.experimental.pallas import tpu as pltpu

LANES = 128
ACC_SUBLANES = 8                 # one f32 vreg per accumulator slot
TILE_BYTES_PER_STREAM = 1 << 20  # ~1 MiB per input stream per grid step
SMALL_INPUT_ELEMS = 1 << 16      # below this, fused XLA beats kernel fixed cost


def _sublane_multiple(*dtypes):
    """Minimum sublane multiple for the block shape given the input dtypes."""
    m = 8
    for dt in dtypes:
        m = max(m, 32 // max(1, jnp.dtype(dt).itemsize))  # f32:8, bf16:16, i8:32
    return m


def _dice_partial_kernel(x_ref, t_ref, o_ref, acc_ref, *,
                         steps_total, steps_per_shard, tail_rows, has_phantom):
    s = pl.program_id(0)             # shard axis ("parallel": TCs on v7x)
    k = pl.program_id(1)             # sequential reduction axis
    g = s * steps_per_shard + k      # global block index
    last_k = pl.num_programs(1) - 1

    @pl.when(k == 0)
    def _():
        acc_ref[...] = jnp.zeros_like(acc_ref)

    x = x_ref[...].astype(jnp.float32)     # upcast in-register, not in HBM
    t = t_ref[...].astype(jnp.float32)
    # sigmoid(x) == 0.5*tanh(0.5*x) + 0.5: one EUP op + 2 VPU ops, exact at
    # saturation, cheaper than the exp/divide lowering (keeps v7x HBM-bound).
    sig = 0.5 * jnp.tanh(0.5 * x) + 0.5

    def accumulate(sv, tv):
        # (tile_rows,128) -> (8,128): pure vreg-to-vreg adds (VALU only); the
        # cross-lane/sublane reduction is deferred to the tiny final combine.
        def fold(v):
            return jnp.sum(v.reshape(-1, ACC_SUBLANES, LANES), axis=0)
        acc_ref[0] += fold(sv * tv)
        acc_ref[1] += fold(sv)
        acc_ref[2] += fold(tv)

    # Static case analysis: the hot (full, valid) block pays for no mask.
    if not tail_rows and not has_phantom:
        accumulate(sig, t)
    else:
        full_ok = None
        if has_phantom:
            full_ok = g < steps_total                  # phantom steps add nothing
        if tail_rows:
            not_tail = g != steps_total - 1
            full_ok = not_tail if full_ok is None else jnp.logical_and(full_ok, not_tail)

        @pl.when(full_ok)
        def _():
            accumulate(sig, t)

        if tail_rows:
            @pl.when(g == steps_total - 1)
            def _():
                # Ragged last block: rows >= tail_rows are out-of-bounds reads
                # (undefined data); the select discards them (incl. any NaN)
                # before anything can propagate into the sums.
                row_idx = jax.lax.broadcasted_iota(jnp.int32, sig.shape, 0)
                m = row_idx < tail_rows
                accumulate(jnp.where(m, sig, 0.0), jnp.where(m, t, 0.0))

    @pl.when(k == last_k)
    def _():
        o_ref[0] = acc_ref[...]


def _sums_jax(x, t):
    """Plain-JAX (sum(sig*t), sum(sig), sum(t)) for tiny inputs / remainders."""
    xs = jax.nn.sigmoid(x.astype(jnp.float32).reshape(-1))
    ts = t.astype(jnp.float32).reshape(-1)
    return jnp.sum(xs * ts), jnp.sum(xs), jnp.sum(ts)


def dice_loss(inputs, targets, smooth=1.0, *,
              small_input_threshold=SMALL_INPUT_ELEMS):
    """Pallas implementation of DiceLoss.forward (returns a scalar f32)."""
    n_total = inputs.size
    assert targets.size == n_total, "inputs and targets must have equal numel"

    if n_total <= small_input_threshold:
        # Tiny tensors: a fused XLA reduction beats the kernel fixed cost.
        inter, s_sum, t_sum = _sums_jax(inputs, targets)
    else:
        x = jnp.reshape(inputs, (-1,))   # C-order flatten == torch .view(-1); free
        t = jnp.reshape(targets, (-1,))

        sub = _sublane_multiple(x.dtype, t.dtype)
        gran = sub * LANES
        n_main = (n_total // gran) * gran     # aligned prefix through the kernel
        rem = n_total - n_main                # < gran elems: plain-JAX epilogue

        # No jnp.pad: aligned case is copy-free; ragged case only slices the
        # prefix (the sub-gran remainder is summed in JAX, never streamed twice
        # through a padded copy).
        xm, tm_ = (x[:n_main], t[:n_main]) if rem else (x, t)
        rows = n_main // LANES
        xm = xm.reshape(rows, LANES)
        tm_ = tm_.reshape(rows, LANES)

        min_itemsize = min(jnp.dtype(x.dtype).itemsize, jnp.dtype(t.dtype).itemsize)
        cap = TILE_BYTES_PER_STREAM // (LANES * min_itemsize)  # 2048 f32 / 4096 bf16
        cap -= cap % sub
        tile_rows = rows if rows <= cap else cap

        steps_total = pl.cdiv(rows, tile_rows)
        n_shards = 2 if steps_total >= 2 else 1      # always use both TCs on v7x
        steps_per_shard = pl.cdiv(steps_total, n_shards)
        has_phantom = n_shards * steps_per_shard != steps_total
        tail_rows = rows % tile_rows                 # 0 => every block is full

        def in_map(s, k):
            g = s * steps_per_shard + k
            if has_phantom:
                g = jnp.minimum(g, steps_total - 1)  # clamp phantom steps
            return (g, 0)

        kernel = functools.partial(
            _dice_partial_kernel,
            steps_total=steps_total, steps_per_shard=steps_per_shard,
            tail_rows=tail_rows, has_phantom=has_phantom)

        bytes_accessed = n_main * (jnp.dtype(x.dtype).itemsize
                                   + jnp.dtype(t.dtype).itemsize)
        cost = pl.CostEstimate(flops=7 * n_main, transcendentals=n_main,
                               bytes_accessed=bytes_accessed)

        partials = pl.pallas_call(
            kernel,
            out_shape=jax.ShapeDtypeStruct((n_shards, 3, ACC_SUBLANES, LANES),
                                           jnp.float32),
            grid_spec=pltpu.PrefetchScalarGridSpec(
                num_scalar_prefetch=0,
                grid=(n_shards, steps_per_shard),
                in_specs=[
                    pl.BlockSpec((tile_rows, LANES), in_map),
                    pl.BlockSpec((tile_rows, LANES), in_map),
                ],
                out_specs=pl.BlockSpec((1, 3, ACC_SUBLANES, LANES),
                                       lambda s, k: (s, 0, 0, 0)),
                scratch_shapes=[pltpu.VMEM((3, ACC_SUBLANES, LANES), jnp.float32)],
            ),
            compiler_params=pltpu.CompilerParams(
                dimension_semantics=("parallel", "arbitrary"),
                vmem_limit_bytes=32 * 1024 * 1024,
            ),
            cost_estimate=cost,
        )(xm, tm_)

        # Tiny final combine: one cross-lane reduction per sum + dice formula.
        inter = jnp.sum(partials[:, 0])
        s_sum = jnp.sum(partials[:, 1])
        t_sum = jnp.sum(partials[:, 2])

        if rem:  # < gran elements, a few KiB at most
            ti, ts_, tt = _sums_jax(x[n_main:], t[n_main:])
            inter = inter + ti
            s_sum = s_sum + ts_
            t_sum = t_sum + tt

    smooth = jnp.float32(smooth)
    dice = (2.0 * inter + smooth) / (s_sum + t_sum + smooth)
    return (1.0 - dice).astype(jnp.float32)


def dice_loss_ref(inputs, targets, smooth=1.0):
    s = jax.nn.sigmoid(inputs.astype(jnp.float32)).reshape(-1)
    t = targets.astype(jnp.float32).reshape(-1)
    inter = jnp.sum(s * t)
    dice = (2.0 * inter + smooth) / (jnp.sum(s) + jnp.sum(t) + smooth)
    return 1.0 - dice


if __name__ == "__main__":
    key = jax.random.PRNGKey(0)
    ks = jax.random.split(key, 10)

    # 1) Primary small example (NCHW 2x4x16x16, f32), forced through the
    #    Pallas kernel (single (16,128) block), plus the default fast path.
    inputs = jax.random.normal(ks[0], (2, 4, 16, 16), dtype=jnp.float32)
    targets = (jax.random.uniform(ks[1], (2, 4, 16, 16)) > 0.5).astype(jnp.float32)
    ref = dice_loss_ref(inputs, targets, smooth=1.0)
    loss_k = jax.block_until_ready(dice_loss(inputs, targets, smooth=1.0,
                                             small_input_threshold=0))
    assert jnp.allclose(loss_k, ref, atol=1e-5, rtol=1e-4), (loss_k, ref)
    loss_fast = jax.block_until_ready(dice_loss(inputs, targets, smooth=1.0))
    assert jnp.allclose(loss_fast, ref, atol=1e-5, rtol=1e-4), (loss_fast, ref)

    # 2) Aligned f32 case: single big tile, zero-copy wrapper path.
    a = jax.random.normal(ks[2], (2, 3, 128, 200), dtype=jnp.float32)
    b = (jax.random.uniform(ks[3], (2, 3, 128, 200)) > 0.5).astype(jnp.float32)
    l2 = jax.block_until_ready(dice_loss(a, b, smooth=1.0))
    r2 = dice_loss_ref(a, b, smooth=1.0)
    assert jnp.allclose(l2, r2, atol=1e-5, rtol=1e-4), (l2, r2)

    # 3) Ragged f32 case: 2-shard split, masked tail block, JAX remainder.
    a = jax.random.normal(ks[4], (2, 3, 300, 200), dtype=jnp.float32)
    b = (jax.random.uniform(ks[5], (2, 3, 300, 200)) > 0.5).astype(jnp.float32)
    l3 = jax.block_until_ready(dice_loss(a, b, smooth=1.0))
    r3 = dice_loss_ref(a, b, smooth=1.0)
    assert jnp.allclose(l3, r3, atol=1e-5, rtol=1e-4), (l3, r3)

    # 4) Ragged bf16 case: native-dtype streaming, no wrapper upcast/pad.
    a = jax.random.normal(ks[6], (3, 5, 77, 191), dtype=jnp.bfloat16)
    b = (jax.random.uniform(ks[7], (3, 5, 77, 191)) > 0.5).astype(jnp.bfloat16)
    l4 = jax.block_until_ready(dice_loss(a, b, smooth=1.0))
    r4 = dice_loss_ref(a, b, smooth=1.0)
    assert jnp.allclose(l4, r4, atol=1e-5, rtol=1e-4), (l4, r4)

    # 5) Odd step count: exercises the clamped/skipped phantom step of the
    #    unconditional 2-shard split together with the masked tail block.
    a = jax.random.normal(ks[8], (5, 4, 170, 170), dtype=jnp.float32)
    b = (jax.random.uniform(ks[9], (5, 4, 170, 170)) > 0.5).astype(jnp.float32)
    l5 = jax.block_until_ready(dice_loss(a, b, smooth=1.0))
    r5 = dice_loss_ref(a, b, smooth=1.0)
    assert jnp.allclose(l5, r5, atol=1e-5, rtol=1e-4), (l5, r5)

    print("KERNEL_OK")
</pallas_src>

<mosaic_0001>
module attributes {stable_mosaic.version = 11 : i64} {
  func.func @_dice_partial_kernel(%arg0: i32, %arg1: i32, %arg2: memref<16x128xf32, #tpu.memory_space<vmem>>, %arg3: memref<16x128xf32, #tpu.memory_space<vmem>>, %arg4: memref<1x3x8x128xf32, #tpu.memory_space<vmem>>, %arg5: memref<3x8x128xf32, #tpu.memory_space<vmem>>) attributes {dimension_semantics = [#tpu.dimension_semantics<parallel>, #tpu.dimension_semantics<arbitrary>], iteration_bounds = array<i64: 1, 1>, scalar_prefetch = 0 : i64, scratch_operands = 1 : i64, tpu.core_type = #tpu.core_type<tc>, window_params = [{transform_indices = @transform_0, window_bounds = array<i64: 16, 128>}, {transform_indices = @transform_1, window_bounds = array<i64: 16, 128>}, {transform_indices = @transform_2, window_bounds = array<i64: 1, 3, 8, 128>}]} {
    %c0_i32 = arith.constant 0 : i32
    %0 = arith.cmpi eq, %arg1, %c0_i32 : i32
    %1 = arith.extui %0 : i1 to i32
    %c0_i32_0 = arith.constant 0 : i32
    %2 = arith.cmpi ne, %1, %c0_i32_0 : i32
    scf.if %2 {
      %cst_27 = arith.constant 0.000000e+00 : f32
      %40 = vector.broadcast %cst_27 : f32 to vector<3x8x128xf32>
      %c0_28 = arith.constant 0 : index
      %c0_29 = arith.constant 0 : index
      %c0_30 = arith.constant 0 : index
      %41 = vector.load %arg5[%c0_28, %c0_29, %c0_30] : memref<3x8x128xf32, #tpu.memory_space<vmem>>, vector<3x8x128xf32>
      tpu.vector_store %arg5[%c0_28, %c0_29, %c0_30], %40 {strides = array<i32>} : memref<3x8x128xf32, #tpu.memory_space<vmem>>, vector<3x8x128xf32>,
    } else {
    }
    %c0 = arith.constant 0 : index
    %c0_1 = arith.constant 0 : index
    %3 = vector.load %arg2[%c0, %c0_1] : memref<16x128xf32, #tpu.memory_space<vmem>>, vector<16x128xf32>
    %c0_2 = arith.constant 0 : index
    %c0_3 = arith.constant 0 : index
    %4 = vector.load %arg3[%c0_2, %c0_3] : memref<16x128xf32, #tpu.memory_space<vmem>>, vector<16x128xf32>
    %cst = arith.constant 5.000000e-01 : f32
    %5 = vector.broadcast %cst : f32 to vector<16x128xf32>
    %6 = arith.mulf %5, %3 : vector<16x128xf32>
    %7 = math.tanh %6 : vector<16x128xf32>
    %cst_4 = arith.constant 5.000000e-01 : f32
    %8 = vector.broadcast %cst_4 : f32 to vector<16x128xf32>
    %9 = arith.mulf %8, %7 : vector<16x128xf32>
    %cst_5 = arith.constant 5.000000e-01 : f32
    %10 = vector.broadcast %cst_5 : f32 to vector<16x128xf32>
    %11 = arith.addf %9, %10 : vector<16x128xf32>
    %c0_6 = arith.constant 0 : index
    %c0_7 = arith.constant 0 : index
    %c0_8 = arith.constant 0 : index
    %12 = vector.load %arg5[%c0_6, %c0_7, %c0_8] : memref<3x8x128xf32, #tpu.memory_space<vmem>>, vector<1x8x128xf32>
    %13 = vector.shape_cast %12 : vector<1x8x128xf32> to vector<8x128xf32>
    %14 = arith.mulf %11, %4 : vector<16x128xf32>
    %15 = vector.shape_cast %14 : vector<16x128xf32> to vector<2x8x128xf32>
    %cst_9 = arith.constant dense<0.000000e+00> : vector<8x128xf32>
    %16 = vector.multi_reduction <add>, %15, %cst_9 [0] : vector<2x8x128xf32> to vector<8x128xf32>
    %17 = arith.addf %13, %16 : vector<8x128xf32>
    %c0_10 = arith.constant 0 : index
    %c0_11 = arith.constant 0 : index
    %c0_12 = arith.constant 0 : index
    %18 = vector.load %arg5[%c0_10, %c0_11, %c0_12] : memref<3x8x128xf32, #tpu.memory_space<vmem>>, vector<1x8x128xf32>
    %19 = vector.shape_cast %18 : vector<1x8x128xf32> to vector<8x128xf32>
    %20 = vector.shape_cast %17 : vector<8x128xf32> to vector<1x8x128xf32>
    tpu.vector_store %arg5[%c0_10, %c0_11, %c0_12], %20 {strides = array<i32>} : memref<3x8x128xf32, #tpu.memory_space<vmem>>, vector<1x8x128xf32>,
    %c1 = arith.constant 1 : index
    %c0_13 = arith.constant 0 : index
    %c0_14 = arith.constant 0 : index
    %21 = vector.load %arg5[%c1, %c0_13, %c0_14] : memref<3x8x128xf32, #tpu.memory_space<vmem>>, vector<1x8x128xf32>
    %22 = vector.shape_cast %21 : vector<1x8x128xf32> to vector<8x128xf32>
    %23 = vector.shape_cast %11 : vector<16x128xf32> to vector<2x8x128xf32>
    %cst_15 = arith.constant dense<0.000000e+00> : vector<8x128xf32>
    %24 = vector.multi_reduction <add>, %23, %cst_15 [0] : vector<2x8x128xf32> to vector<8x128xf32>
    %25 = arith.addf %22, %24 : vector<8x128xf32>
    %c1_16 = arith.constant 1 : index
    %c0_17 = arith.constant 0 : index
    %c0_18 = arith.constant 0 : index
    %26 = vector.load %arg5[%c1_16, %c0_17, %c0_18] : memref<3x8x128xf32, #tpu.memory_space<vmem>>, vector<1x8x128xf32>
    %27 = vector.shape_cast %26 : vector<1x8x128xf32> to vector<8x128xf32>
    %28 = vector.shape_cast %25 : vector<8x128xf32> to vector<1x8x128xf32>
    tpu.vector_store %arg5[%c1_16, %c0_17, %c0_18], %28 {strides = array<i32>} : memref<3x8x128xf32, #tpu.memory_space<vmem>>, vector<1x8x128xf32>,
    %c2 = arith.constant 2 : index
    %c0_19 = arith.constant 0 : index
    %c0_20 = arith.constant 0 : index
    %29 = vector.load %arg5[%c2, %c0_19, %c0_20] : memref<3x8x128xf32, #tpu.memory_space<vmem>>, vector<1x8x128xf32>
    %30 = vector.shape_cast %29 : vector<1x8x128xf32> to vector<8x128xf32>
    %31 = vector.shape_cast %4 : vector<16x128xf32> to vector<2x8x128xf32>
    %cst_21 = arith.constant dense<0.000000e+00> : vector<8x128xf32>
    %32 = vector.multi_reduction <add>, %31, %cst_21 [0] : vector<2x8x128xf32> to vector<8x128xf32>
    %33 = arith.addf %30, %32 : vector<8x128xf32>
    %c2_22 = arith.constant 2 : index
    %c0_23 = arith.constant 0 : index
    %c0_24 = arith.constant 0 : index
    %34 = vector.load %arg5[%c2_22, %c0_23, %c0_24] : memref<3x8x128xf32, #tpu.memory_space<vmem>>, vector<1x8x128xf32>
    %35 = vector.shape_cast %34 : vector<1x8x128xf32> to vector<8x128xf32>
    %36 = vector.shape_cast %33 : vector<8x128xf32> to vector<1x8x128xf32>
    tpu.vector_store %arg5[%c2_22, %c0_23, %c0_24], %36 {strides = array<i32>} : memref<3x8x128xf32, #tpu.memory_space<vmem>>, vector<1x8x128xf32>,
    %c0_i32_25 = arith.constant 0 : i32
    %37 = arith.cmpi eq, %arg1, %c0_i32_25 : i32
    %38 = arith.extui %37 : i1 to i32
    %c0_i32_26 = arith.constant 0 : i32
    %39 = arith.cmpi ne, %38, %c0_i32_26 : i32
    scf.if %39 {
      %c0_27 = arith.constant 0 : index
      %c0_28 = arith.constant 0 : index
      %c0_29 = arith.constant 0 : index
      %40 = vector.load %arg5[%c0_27, %c0_28, %c0_29] : memref<3x8x128xf32, #tpu.memory_space<vmem>>, vector<3x8x128xf32>
      %c0_30 = arith.constant 0 : index
      %c0_31 = arith.constant 0 : index
      %c0_32 = arith.constant 0 : index
      %c0_33 = arith.constant 0 : index
      %41 = vector.load %arg4[%c0_30, %c0_31, %c0_32, %c0_33] : memref<1x3x8x128xf32, #tpu.memory_space<vmem>>, vector<1x3x8x128xf32>
      %42 = vector.shape_cast %41 : vector<1x3x8x128xf32> to vector<3x8x128xf32>
      %43 = vector.shape_cast %40 : vector<3x8x128xf32> to vector<1x3x8x128xf32>
      tpu.vector_store %arg4[%c0_30, %c0_31, %c0_32, %c0_33], %43 {strides = array<i32>} : memref<1x3x8x128xf32, #tpu.memory_space<vmem>>, vector<1x3x8x128xf32>,
    } else {
    }
    return
  }
  func.func @transform_0(%arg0: i32, %arg1: i32) -> (i32, i32) {
    %c1_i32 = arith.constant 1 : i32
    %0 = arith.muli %arg0, %c1_i32 : i32
    %1 = arith.addi %0, %arg1 : i32
    %c0_i32 = arith.constant 0 : i32
    %c0_i32_0 = arith.constant 0 : i32
    return %1, %c0_i32 : i32, i32
  }
  func.func @transform_1(%arg0: i32, %arg1: i32) -> (i32, i32) {
    %c1_i32 = arith.constant 1 : i32
    %0 = arith.muli %arg0, %c1_i32 : i32
    %1 = arith.addi %0, %arg1 : i32
    %c0_i32 = arith.constant 0 : i32
    %c0_i32_0 = arith.constant 0 : i32
    return %1, %c0_i32 : i32, i32
  }
  func.func @transform_2(%arg0: i32, %arg1: i32) -> (i32, i32, i32, i32) {
    %c0_i32 = arith.constant 0 : i32
    %c0_i32_0 = arith.constant 0 : i32
    %c0_i32_1 = arith.constant 0 : i32
    %c0_i32_2 = arith.constant 0 : i32
    return %arg0, %c0_i32, %c0_i32_0, %c0_i32_1 : i32, i32, i32, i32
  }
}

</mosaic_0001>

<llo_original>
// kernel: tpu_custom_call.1
$region0: #{tpu_custom_call.1}
  #allocation0 [shape = 'u32[]', space=smem, size = 0x4, offset = 0x4, fixed_abs, tag = 'smem constant byte address 0x4 - core index']
  #allocation1 [shape = 'u32[72,128]{1,0:T(1,128)}', space=vmem, size = 0x9000, scoped, tag = 'internal scratch']
  #allocation2 [shape = 'f32[3,8,128]{2,1,0:T(8,128)}', space=vmem, size = 0x3000, scoped, tag = 'scratch operand']
  %s0 = inlined_call_operand.hbm [shape: f32[16,128], index: 0, kind: input, shape index: {}]
  %s1 = inlined_call_operand.hbm [shape: f32[16,128], index: 1, kind: input, shape index: {}]
  %s2 = inlined_call_operand.hbm [shape: f32[1,3,8,128], index: 2, kind: output, shape index: {}]
  %s3 = sld [smem:[#allocation0]]
  $region34: #{tpu_custom_call.1} parent=0
    _
  %s5 = ssub.s32 1, %s3
  %s6 = scalar_select 0, %s5, %s3
  $region1: #{tpu_custom_call.1} parent=0
    #allocation3 [shape = 'u8[8192]{0}', space=vmem, size = 0x2000, scoped, tag = 'input window, operand 0, single buffered']
    #allocation4 [shape = 's32[1]{0}', space=sflag, size = 0x4, scoped, tag = 'scoped memory for tpu_custom_call.1']
    #allocation5 [shape = 's32[1]{0}', space=sflag, size = 0x4, scoped, tag = 'scoped memory for tpu_custom_call.1']
    #allocation6 [shape = 'u8[8192]{0}', space=vmem, size = 0x2000, scoped, tag = 'input window, operand 1, single buffered']
    #allocation7 [shape = 's32[1]{0}', space=sflag, size = 0x4, scoped, tag = 'scoped memory for tpu_custom_call.1']
    #allocation8 [shape = 'u8[12288]{0}', space=vmem, size = 0x3000, scoped, tag = 'output window, operand 0, single buffered']
    %7 = vsyncpa [#allocation4], 0
    %8 = vsyncpa [#allocation7], 0
    %9 = vsyncpa [#allocation5], 0
    // Predicated region
    $region2: #{tpu_custom_call.1} parent=1 // pred_check
      _
    $region3: #{tpu_custom_call.1} parent=1 // pred_check_branch
      %11 = sbr.rel (0) target = $region5
    $region4: #{tpu_custom_call.1} parent=1 // pred_region
      %s12 = sadd.s32 0, 0
      %s13 = smul.u32 2, %s12
      %15 = vsyncadd [#allocation4], 0
      %s16 = smul.addr %s13, 8
      %s17 = scalar_lea.hbm %s0, %s16
      %s18 = sshll.u32 %s17, 4
      %s19 = int_to_ptr.hbm [resolvable:$true] %s18
      %s20 = sshll.u32 [#allocation3], 4
      %s21 = int_to_ptr.vmem [resolvable:$true] %s20
      %26 = dma.hbm_to_vmem [thread:$0]  %s19, 256, %s21, [#allocation4], 128, 128, 8
    $region5: #{tpu_custom_call.1} parent=1 // pred_fallthru
      _
    // Predicated region
    $region6: #{tpu_custom_call.1} parent=1 // pred_check
      _
    $region7: #{tpu_custom_call.1} parent=1 // pred_check_branch
      %28 = sbr.rel (0) target = $region9
    $region8: #{tpu_custom_call.1} parent=1 // pred_region
      %s29 = sadd.s32 0, 0
      %s30 = smul.u32 2, %s29
      %32 = vsyncadd [#allocation7], 0
      %s33 = smul.addr %s30, 8
      %s34 = scalar_lea.hbm %s1, %s33
      %s35 = sshll.u32 %s34, 4
      %s36 = int_to_ptr.hbm [resolvable:$true] %s35
      %s37 = sshll.u32 [#allocation6], 4
      %s38 = int_to_ptr.vmem [resolvable:$true] %s37
      %43 = dma.hbm_to_vmem [thread:$0]  %s36, 256, %s38, [#allocation7], 128, 128, 8
    $region9: #{tpu_custom_call.1} parent=1 // pred_fallthru
      _
    // Predicated region
    $region10: #{tpu_custom_call.1} parent=1 // pred_check
      _
    $region11: #{tpu_custom_call.1} parent=1 // pred_check_branch
      %45 = sbr.rel (0) target = $region13
    $region12: #{tpu_custom_call.1} parent=1 // pred_region
      %47 = dma.done [#allocation4], 256
    $region13: #{tpu_custom_call.1} parent=1 // pred_fallthru
      _
    // Predicated region
    $region14: #{tpu_custom_call.1} parent=1 // pred_check
      _
    $region15: #{tpu_custom_call.1} parent=1 // pred_check_branch
      %49 = sbr.rel (0) target = $region17
    $region16: #{tpu_custom_call.1} parent=1 // pred_region
      %51 = dma.done [#allocation7], 256
    $region17: #{tpu_custom_call.1} parent=1 // pred_fallthru
      _
    %s52 = sadd.s32 0, 0
    %s53 = smul.u32 2, %s52
    %s54 = sadd.s32 0, 0
    %s55 = smul.u32 2, %s54
    %p56 = scmp.eq.s32.totalorder 0, 0
    // Predicated region
    $region18: #{tpu_custom_call.1} parent=1 // pred_check
      %p57 = pneg %p56
    $region19: #{tpu_custom_call.1} parent=1 // pred_check_branch
      %59 = sbr.rel (%p57) target = $region21
    $region20: #{tpu_custom_call.1} parent=1 // pred_region
      %60 = vst [vmem:[#allocation2] sm:$0xff] 0.0
      %61 = vst [vmem:[#allocation2 + $0x8] sm:$0xff] 0.0
      %62 = vst [vmem:[#allocation2 + $0x10] sm:$0xff] 0.0
    $region21: #{tpu_custom_call.1} parent=1 // pred_fallthru
      _
    %v63 = vld [vmem:[#allocation3] sm:$0xff]
    %v64 = vld [vmem:[#allocation3 + $0x8] sm:$0xff]
    %v65 = vld [vmem:[#allocation6] sm:$0xff]
    %v66 = vld [vmem:[#allocation6 + $0x8] sm:$0xff]
    %v67 = vmul.f32 %v63, 0.5
    %v68 = vmul.f32 %v64, 0.5
    %v69 = vtanh.pop %v67
    %v70 = vtanh.pop %v68
    %v71 = vmul.f32 %v69, 0.5
    %v72 = vmul.f32 %v70, 0.5
    %v73 = vadd.f32 %v71, 0.5
    %v74 = vadd.f32 %v72, 0.5
    %v75 = vld [vmem:[#allocation2] sm:$0xff]
    %v76 = vmul.f32 %v73, %v65
    %v77 = vmul.f32 %v74, %v66
    %v78 = vadd.f32 %v76, %v77
    %v79 = vadd.f32 %v75, %v78
    %80 = vst [vmem:[#allocation2] sm:$0xff] %v79
    %s81 = scalar_lea.vmem [#allocation2], 8
    %v82 = vld [vmem:[%s81] sm:$0xff]
    %v83 = vadd.f32 %v73, %v74
    %v84 = vadd.f32 %v82, %v83
    %85 = vst [vmem:[%s81] sm:$0xff] %v84
    %s86 = scalar_lea.vmem [#allocation2], 16
    %v87 = vld [vmem:[%s86] sm:$0xff]
    %v88 = vadd.f32 %v65, %v66
    %v89 = vadd.f32 %v87, %v88
    %90 = vst [vmem:[%s86] sm:$0xff] %v89
    // Predicated region
    $region22: #{tpu_custom_call.1} parent=1 // pred_check
      %p91 = pneg %p56
    $region23: #{tpu_custom_call.1} parent=1 // pred_check_branch
      %93 = sbr.rel (%p91) target = $region25
    $region24: #{tpu_custom_call.1} parent=1 // pred_region
      %v94 = vld [vmem:[#allocation2] sm:$0xff]
      %v95 = vld [vmem:[#allocation2 + $0x8] sm:$0xff]
      %v96 = vld [vmem:[#allocation2 + $0x10] sm:$0xff]
      %97 = vst [vmem:[#allocation8] sm:$0xff] %v94
      %98 = vst [vmem:[#allocation8 + $0x8] sm:$0xff] %v95
      %99 = vst [vmem:[#allocation8 + $0x10] sm:$0xff] %v96
    $region25: #{tpu_custom_call.1} parent=1 // pred_fallthru
      _
    // Predicated region
    $region26: #{tpu_custom_call.1} parent=1 // pred_check
      _
    $region27: #{tpu_custom_call.1} parent=1 // pred_check_branch
      %101 = sbr.rel (0) target = $region29
    $region28: #{tpu_custom_call.1} parent=1 // pred_region
      %103 = vsyncadd [#allocation5], 0
      %s104 = sshll.u32 [#allocation8], 4
      %s105 = int_to_ptr.vmem [resolvable:$true] %s104
      %s106 = sshll.u32 %s2, 4
      %s107 = int_to_ptr.hbm [resolvable:$true] %s106
      %112 = dma.vmem_to_hbm [thread:$0]  %s105, 384, %s107, [#allocation5], 128, 128, 8
    $region29: #{tpu_custom_call.1} parent=1 // pred_fallthru
      _
    // Predicated region
    $region30: #{tpu_custom_call.1} parent=1 // pred_check
      _
    $region31: #{tpu_custom_call.1} parent=1 // pred_check_branch
      %114 = sbr.rel (0) target = $region33
    $region32: #{tpu_custom_call.1} parent=1 // pred_region
      %116 = dma.done [#allocation5], 384
    $region33: #{tpu_custom_call.1} parent=1 // pred_fallthru
      _
    %117 = vsyncpa [#allocation4], 1
    %118 = vsyncpa [#allocation7], 1
    %119 = vsyncpa [#allocation5], 1

</llo_original>
